<compile_context>
chip_gen: v7x
topology: tpu7x:2x2x1
jax: 0.10.0
libtpu: 0.0.40
codegen_flags: <defaults>
</compile_context>

<pallas_src>
import math
from functools import partial

import jax
import jax.numpy as jnp
from jax.experimental import pallas as pl
from jax.experimental.pallas import tpu as pltpu

_LANE = 128  # lane width: keeps output stores full-width (unmasked vst)


# ----------------------------------------------------------------------------
# Kernels (pure blocked elementwise ops on (block_rows, 128) tiles)
# ----------------------------------------------------------------------------
def _pe_add_kernel(x_ref, pe_ref, o_ref):
    o_ref[...] = (x_ref[...] + pe_ref[...]).astype(o_ref.dtype)


def _pe_add_dropout_kernel(x_ref, pe_ref, u_ref, o_ref, *, p, scale):
    # Inverted dropout: zero with prob p, scale survivors by 1/(1-p).
    val = x_ref[...] + pe_ref[...]
    keep = u_ref[...] >= jnp.float32(p)                      # keep prob = 1 - p
    o_ref[...] = jnp.where(keep,
                           val * jnp.asarray(scale, val.dtype),
                           jnp.zeros_like(val)).astype(o_ref.dtype)


# ----------------------------------------------------------------------------
# Wrapper
# ----------------------------------------------------------------------------
def positional_encoding_forward(x, frame_idxs, pe, *, dropout_p=0.1,
                                training=False, rng_key=None,
                                block_rows=1024):
    """x: [batch, d_model]; frame_idxs: int [batch]; pe: [max_len, d_model]."""
    batch, d_model = x.shape
    max_len = pe.shape[0]
    assert block_rows % 8 == 0, "block_rows must be a multiple of 8"

    # Gather the needed pe rows once with XLA (clip indices for safety), so the
    # Pallas kernel is a pure blocked add(+dropout) on contiguous data.
    idx = jnp.clip(jnp.asarray(frame_idxs, jnp.int32), 0, max_len - 1)
    pe_g = jnp.take(pe, idx, axis=0).astype(x.dtype)          # [batch, d_model]

    # Lane-dense flattening: view the elementwise problem as [n_rows, 128].
    total = batch * d_model
    n_rows = pl.cdiv(total, _LANE)
    if n_rows >= block_rows:
        tb = block_rows                                        # multiple of 8
    else:
        tb = max(8, 8 * pl.cdiv(n_rows, 8))                    # sublane-aligned
    n_rows = pl.cdiv(n_rows, tb) * tb
    padded_total = n_rows * _LANE
    grid = (n_rows // tb,)

    def to_tiles(a):
        a = a.reshape(-1)
        if padded_total != total:
            a = jnp.pad(a, (0, padded_total - total))
        return a.reshape(n_rows, _LANE)

    x2, pe2 = to_tiles(x), to_tiles(pe_g)

    blk = pl.BlockSpec((tb, _LANE), lambda i: (i, 0))
    in_specs = [blk, blk]
    args = [x2, pe2]

    use_dropout = bool(training) and float(dropout_p) > 0.0
    if use_dropout:
        if rng_key is None:
            rng_key = jax.random.PRNGKey(0)
        # Portable RNG (works on TPU and in interpret mode); streamed per-block.
        # TODO(synk): switch to in-kernel pltpu.prng_random_bits once the
        # hardware PRNG lowering is available in this environment.
        u = jax.random.uniform(rng_key, (n_rows, _LANE), dtype=jnp.float32)
        in_specs.append(blk)
        args.append(u)
        kernel = partial(_pe_add_dropout_kernel,
                         p=float(dropout_p),
                         scale=1.0 / (1.0 - float(dropout_p)))
    else:
        kernel = _pe_add_kernel

    out2 = pl.pallas_call(
        kernel,
        out_shape=jax.ShapeDtypeStruct((n_rows, _LANE), x.dtype),
        grid_spec=pltpu.PrefetchScalarGridSpec(
            num_scalar_prefetch=0,
            grid=grid,
            in_specs=in_specs,
            out_specs=pl.BlockSpec((tb, _LANE), lambda i: (i, 0)),
        ),
        compiler_params=pltpu.CompilerParams(
            dimension_semantics=("parallel",)),
    )(*args)

    return out2.reshape(-1)[:total].reshape(batch, d_model)


# ----------------------------------------------------------------------------
# Deterministic buffer construction, mirroring __init__
# ----------------------------------------------------------------------------
def make_pe_table(d_model, max_len):
    position = jnp.arange(max_len, dtype=jnp.float32)[:, None]          # [max_len, 1]
    div_term = jnp.exp(jnp.arange(0, d_model, 2, dtype=jnp.float32)
                       * (-math.log(10000.0) / d_model))                # [d_model/2]
    sin = jnp.sin(position * div_term)
    cos = jnp.cos(position * div_term)
    # interleave -> pe[:, 0::2] = sin, pe[:, 1::2] = cos
    return jnp.stack([sin, cos], axis=-1).reshape(max_len, d_model)


if __name__ == "__main__":
    # --- small demo shapes matching the module's forward -------------------
    batch, d_model, max_len = 4, 32, 64
    key = jax.random.PRNGKey(0)
    kx, ki, kd, kx2, ki2 = jax.random.split(key, 5)

    x = jax.random.normal(kx, (batch, d_model), dtype=jnp.float32)
    frame_idxs = jax.random.randint(ki, (batch,), 0, max_len, dtype=jnp.int32)
    pe = make_pe_table(d_model, max_len)

    # Eval mode (dropout = identity): exact semantics x + pe[frame_idxs].
    out = positional_encoding_forward(x, frame_idxs, pe,
                                      dropout_p=0.1, training=False)
    out = jax.block_until_ready(out)
    ref = x + pe[frame_idxs]
    assert out.shape == (batch, d_model)
    assert jnp.allclose(out, ref, atol=1e-6, rtol=1e-6), "eval mismatch"

    # Training mode: every element is either 0 or ref / (1 - p).
    p = 0.1
    out_tr = positional_encoding_forward(x, frame_idxs, pe, dropout_p=p,
                                         training=True, rng_key=kd)
    out_tr = jax.block_until_ready(out_tr)
    scaled = ref / (1.0 - p)
    ok = jnp.logical_or(jnp.isclose(out_tr, 0.0, atol=1e-6),
                        jnp.isclose(out_tr, scaled, atol=1e-5, rtol=1e-5))
    assert bool(jnp.all(ok)), "training-mode values not in {0, ref/(1-p)}"

    # Second check: exercises flatten-padding and the multi-block grid path
    # (small block_rows so several grid steps run even at tiny sizes).
    b2, d2, ml2 = 40, 200, 128
    x2 = jax.random.normal(kx2, (b2, d2), dtype=jnp.float32)
    fi2 = jax.random.randint(ki2, (b2,), 0, ml2, dtype=jnp.int32)
    pe2 = make_pe_table(d2, ml2)
    out2 = positional_encoding_forward(x2, fi2, pe2, dropout_p=0.1,
                                       training=False, block_rows=8)
    out2 = jax.block_until_ready(out2)
    ref2 = x2 + pe2[fi2]
    assert jnp.allclose(out2, ref2, atol=1e-6, rtol=1e-6), "tiled-path mismatch"

    print("KERNEL_OK")
</pallas_src>

<mosaic_0001>
module attributes {stable_mosaic.version = 11 : i64} {
  func.func @_pe_add_kernel(%arg0: i32, %arg1: memref<8x128xf32, #tpu.memory_space<vmem>>, %arg2: memref<8x128xf32, #tpu.memory_space<vmem>>, %arg3: memref<8x128xf32, #tpu.memory_space<vmem>>) attributes {dimension_semantics = [#tpu.dimension_semantics<parallel>], iteration_bounds = array<i64: 1>, scalar_prefetch = 0 : i64, scratch_operands = 0 : i64, tpu.core_type = #tpu.core_type<tc>, window_params = [{transform_indices = @transform_0, window_bounds = array<i64: 8, 128>}, {transform_indices = @transform_1, window_bounds = array<i64: 8, 128>}, {transform_indices = @transform_2, window_bounds = array<i64: 8, 128>}]} {
    %c0 = arith.constant 0 : index
    %c0_0 = arith.constant 0 : index
    %0 = vector.load %arg1[%c0, %c0_0] : memref<8x128xf32, #tpu.memory_space<vmem>>, vector<8x128xf32>
    %c0_1 = arith.constant 0 : index
    %c0_2 = arith.constant 0 : index
    %1 = vector.load %arg2[%c0_1, %c0_2] : memref<8x128xf32, #tpu.memory_space<vmem>>, vector<8x128xf32>
    %2 = arith.addf %0, %1 : vector<8x128xf32>
    %c0_3 = arith.constant 0 : index
    %c0_4 = arith.constant 0 : index
    %3 = vector.load %arg3[%c0_3, %c0_4] : memref<8x128xf32, #tpu.memory_space<vmem>>, vector<8x128xf32>
    tpu.vector_store %arg3[%c0_3, %c0_4], %2 {strides = array<i32>} : memref<8x128xf32, #tpu.memory_space<vmem>>, vector<8x128xf32>,
    return
  }
  func.func @transform_0(%arg0: i32) -> (i32, i32) {
    %c0_i32 = arith.constant 0 : i32
    %c0_i32_0 = arith.constant 0 : i32
    return %arg0, %c0_i32 : i32, i32
  }
  func.func @transform_1(%arg0: i32) -> (i32, i32) {
    %c0_i32 = arith.constant 0 : i32
    %c0_i32_0 = arith.constant 0 : i32
    return %arg0, %c0_i32 : i32, i32
  }
  func.func @transform_2(%arg0: i32) -> (i32, i32) {
    %c0_i32 = arith.constant 0 : i32
    %c0_i32_0 = arith.constant 0 : i32
    return %arg0, %c0_i32 : i32, i32
  }
}

</mosaic_0001>

<llo_original>
// kernel: tpu_custom_call.1
$region0: #{tpu_custom_call.1}
  #allocation0 [shape = 'u32[]', space=smem, size = 0x4, offset = 0x4, fixed_abs, tag = 'smem constant byte address 0x4 - core index']
  #allocation1 [shape = 'u32[144,128]{1,0:T(1,128)}', space=vmem, size = 0x12000, scoped, tag = 'internal scratch']
  %s0 = inlined_call_operand.hbm [shape: f32[8,128], index: 0, kind: input, shape index: {}]
  %s1 = inlined_call_operand.hbm [shape: f32[8,128], index: 1, kind: input, shape index: {}]
  %s2 = inlined_call_operand.hbm [shape: f32[8,128], index: 2, kind: output, shape index: {}]
  %s3 = sld [smem:[#allocation0]]
  $region26: #{tpu_custom_call.1} parent=0
    _
  %s5 = ssub.s32 1, %s3
  %s6 = scalar_select 0, %s5, %s3
  $region1: #{tpu_custom_call.1} parent=0
    #allocation2 [shape = 'u8[4096]{0}', space=vmem, size = 0x1000, scoped, tag = 'input window, operand 0, single buffered']
    #allocation3 [shape = 's32[1]{0}', space=sflag, size = 0x4, scoped, tag = 'scoped memory for tpu_custom_call.1']
    #allocation4 [shape = 's32[1]{0}', space=sflag, size = 0x4, scoped, tag = 'scoped memory for tpu_custom_call.1']
    #allocation5 [shape = 'u8[4096]{0}', space=vmem, size = 0x1000, scoped, tag = 'input window, operand 1, single buffered']
    #allocation6 [shape = 's32[1]{0}', space=sflag, size = 0x4, scoped, tag = 'scoped memory for tpu_custom_call.1']
    #allocation7 [shape = 'u8[4096]{0}', space=vmem, size = 0x1000, scoped, tag = 'output window, operand 0, single buffered']
    %7 = vsyncpa [#allocation3], 0
    %8 = vsyncpa [#allocation6], 0
    %9 = vsyncpa [#allocation4], 0
    // Predicated region
    $region2: #{tpu_custom_call.1} parent=1 // pred_check
      _
    $region3: #{tpu_custom_call.1} parent=1 // pred_check_branch
      %11 = sbr.rel (0) target = $region5
    $region4: #{tpu_custom_call.1} parent=1 // pred_region
      %s13 = ssub.s32 128, 128
      %14 = vsyncadd [#allocation3], %s13
      %s16 = sshll.u32 [#allocation2], 4
      %s17 = int_to_ptr.vmem [resolvable:$true] %s16
      %19 = dma.hbm_to_vmem [thread:$0]  %s0, 128, %s17, [#allocation3]
    $region5: #{tpu_custom_call.1} parent=1 // pred_fallthru
      _
    // Predicated region
    $region6: #{tpu_custom_call.1} parent=1 // pred_check
      _
    $region7: #{tpu_custom_call.1} parent=1 // pred_check_branch
      %21 = sbr.rel (0) target = $region9
    $region8: #{tpu_custom_call.1} parent=1 // pred_region
      %s23 = ssub.s32 128, 128
      %24 = vsyncadd [#allocation6], %s23
      %s26 = sshll.u32 [#allocation5], 4
      %s27 = int_to_ptr.vmem [resolvable:$true] %s26
      %29 = dma.hbm_to_vmem [thread:$0]  %s1, 128, %s27, [#allocation6]
    $region9: #{tpu_custom_call.1} parent=1 // pred_fallthru
      _
    // Predicated region
    $region10: #{tpu_custom_call.1} parent=1 // pred_check
      _
    $region11: #{tpu_custom_call.1} parent=1 // pred_check_branch
      %31 = sbr.rel (0) target = $region13
    $region12: #{tpu_custom_call.1} parent=1 // pred_region
      %32 = dma.done [#allocation3], 128
    $region13: #{tpu_custom_call.1} parent=1 // pred_fallthru
      _
    // Predicated region
    $region14: #{tpu_custom_call.1} parent=1 // pred_check
      _
    $region15: #{tpu_custom_call.1} parent=1 // pred_check_branch
      %34 = sbr.rel (0) target = $region17
    $region16: #{tpu_custom_call.1} parent=1 // pred_region
      %35 = dma.done [#allocation6], 128
    $region17: #{tpu_custom_call.1} parent=1 // pred_fallthru
      _
    %v36 = vld [vmem:[#allocation2] sm:$0xff]
    %v37 = vld [vmem:[#allocation5] sm:$0xff]
    %v38 = vadd.f32 %v36, %v37
    %39 = vst [vmem:[#allocation7] sm:$0xff] %v38
    // Predicated region
    $region18: #{tpu_custom_call.1} parent=1 // pred_check
      _
    $region19: #{tpu_custom_call.1} parent=1 // pred_check_branch
      %41 = sbr.rel (0) target = $region21
    $region20: #{tpu_custom_call.1} parent=1 // pred_region
      %s43 = ssub.s32 128, 128
      %44 = vsyncadd [#allocation4], %s43
      %s46 = sshll.u32 [#allocation7], 4
      %s47 = int_to_ptr.vmem [resolvable:$true] %s46
      %49 = dma.vmem_to_hbm [thread:$0]  %s47, 128, %s2, [#allocation4]
    $region21: #{tpu_custom_call.1} parent=1 // pred_fallthru
      _
    // Predicated region
    $region22: #{tpu_custom_call.1} parent=1 // pred_check
      _
    $region23: #{tpu_custom_call.1} parent=1 // pred_check_branch
      %51 = sbr.rel (0) target = $region25
    $region24: #{tpu_custom_call.1} parent=1 // pred_region
      %52 = dma.done [#allocation4], 128
    $region25: #{tpu_custom_call.1} parent=1 // pred_fallthru
      _
    %53 = vsyncpa [#allocation3], 1
    %54 = vsyncpa [#allocation6], 1
    %55 = vsyncpa [#allocation4], 1

</llo_original>
